<compile_context>
chip_gen: v6e
topology: v6e:2x2x1
jax: 0.10.0
libtpu: 0.0.40
codegen_flags: <defaults>
</compile_context>

<pallas_src>
from functools import partial

import jax
import jax.numpy as jnp
from jax.experimental import pallas as pl
from jax.experimental.pallas import tpu as pltpu


def _round_up(x: int, m: int) -> int:
    return ((x + m - 1) // m) * m


def _sublane_multiple(dtype) -> int:
    # f32 -> 8, bf16 -> 16, int8/fp8 -> 32 (sub-32-bit dtypes pack along sublanes).
    return max(8, 32 // jnp.dtype(dtype).itemsize)


def _choose_tile_rows(n_rows: int, d_model: int, dtype) -> int:
    itemsize = jnp.dtype(dtype).itemsize
    sub = _sublane_multiple(dtype)
    if n_rows <= sub:
        # Single block spanning the full row extent (divisibility not required
        # when the block equals the full dim).
        return n_rows
    # ~2 MiB per block buffer: 4 double-buffered blocks (2 in + 2 out) stay well
    # under the 16/32 MiB scoped defaults and v7x's 64 MiB physical VMEM, while
    # being large enough to amortize the ~0.35us per-grid-step overhead.
    target_bytes = 2 << 20
    t = max(target_bytes // (d_model * itemsize), 1)
    t = max((t // sub) * sub, sub)
    # Confine raggedness to the last block only.
    t = min(t, (n_rows // sub) * sub)
    # v7x megacore: keep >=4 grid steps (>=2 per TensorCore) when there is enough
    # work; neutral on single-TC v5e/v6e.
    if n_rows >= 4 * sub:
        t = min(t, _round_up(-(-n_rows // 4), sub))
    return max(t, sub)


def _ln_block(x, alpha, bias, *, eps: float, d_model: int):
    # x: (tile_r, d_model) f32. One fused pass: sum(x) and sum(x*x) together.
    n = float(d_model)
    sum_x = jnp.sum(x, axis=-1, keepdims=True)
    sum_xx = jnp.sum(x * x, axis=-1, keepdims=True)
    mean = sum_x * (1.0 / n)
    # Unbiased variance (torch std default); clamp guards rounding-induced negatives.
    var = jnp.maximum(sum_xx - n * (mean * mean), 0.0) * (1.0 / (n - 1.0))
    std = jnp.sqrt(var)
    # Per-row reciprocal on the EUP (free slot) instead of tile_r*d_model divides;
    # alpha folded into the per-row scale.
    inv = pl.reciprocal(std + eps, approx=True)
    return (alpha * inv) * (x - mean) + bias


def _ln_kernel_static(x_ref, o_ref, *, alpha: float, bias: float, eps: float, d_model: int):
    x = x_ref[...].astype(jnp.float32)
    o_ref[...] = _ln_block(x, alpha, bias, eps=eps, d_model=d_model).astype(o_ref.dtype)


def _ln_kernel_smem(alpha_ref, bias_ref, x_ref, o_ref, *, eps: float, d_model: int):
    x = x_ref[...].astype(jnp.float32)
    o_ref[...] = _ln_block(
        x, alpha_ref[0, 0], bias_ref[0, 0], eps=eps, d_model=d_model
    ).astype(o_ref.dtype)


def layer_normalization(x, alpha=1.0, bias=0.0, *, eps: float = 1e-6):
    """Pallas LayerNormalization: alpha*(x-mean)/(std+eps)+bias over the last dim."""
    orig_shape = x.shape
    d_model = orig_shape[-1]
    assert d_model >= 2, "LayerNormalization requires d_model >= 2 (unbiased std)"

    n_rows = 1
    for s in orig_shape[:-1]:
        n_rows *= s
    xf = x.reshape(n_rows, d_model)  # metadata-only reshape (no extra HBM pass)

    itemsize = jnp.dtype(x.dtype).itemsize
    tile_r = _choose_tile_rows(n_rows, d_model, x.dtype)
    grid = (pl.cdiv(n_rows, tile_r),)  # ragged last block: dead reads, masked writes

    # TODO(synk): for d_model < 128 or not a multiple of 128, lane-pack multiple
    # rows per vreg (segmented reductions) for full lane density; kernel is
    # correct but lane-underutilized in that regime.
    x_spec = pl.BlockSpec((tile_r, d_model), lambda i: (i, 0))
    o_spec = pl.BlockSpec((tile_r, d_model), lambda i: (i, 0))

    cost = pl.CostEstimate(
        flops=7 * n_rows * d_model,
        transcendentals=2 * n_rows,
        bytes_accessed=2 * n_rows * d_model * itemsize,
    )
    tile_bytes = tile_r * d_model * itemsize
    vmem_limit = int(min(max(6 * tile_bytes, 16 << 20), 48 << 20))  # headroom under v7x 64 MiB
    params = pltpu.CompilerParams(
        dimension_semantics=("parallel",),
        vmem_limit_bytes=vmem_limit,
    )

    static_scalars = isinstance(alpha, (int, float)) and isinstance(bias, (int, float))
    if static_scalars:
        kernel = partial(
            _ln_kernel_static,
            alpha=float(alpha), bias=float(bias), eps=float(eps), d_model=d_model,
        )
        out = pl.pallas_call(
            kernel,
            out_shape=jax.ShapeDtypeStruct((n_rows, d_model), x.dtype),
            grid=grid,
            in_specs=[x_spec],
            out_specs=o_spec,
            compiler_params=params,
            cost_estimate=cost,
        )(xf)
    else:
        alpha_s = jnp.asarray(alpha, jnp.float32).reshape(1, 1)
        bias_s = jnp.asarray(bias, jnp.float32).reshape(1, 1)
        kernel = partial(_ln_kernel_smem, eps=float(eps), d_model=d_model)
        out = pl.pallas_call(
            kernel,
            out_shape=jax.ShapeDtypeStruct((n_rows, d_model), x.dtype),
            grid=grid,
            in_specs=[
                pl.BlockSpec(memory_space=pltpu.MemorySpace.SMEM),  # alpha
                pl.BlockSpec(memory_space=pltpu.MemorySpace.SMEM),  # bias
                x_spec,
            ],
            out_specs=o_spec,
            compiler_params=params,
            cost_estimate=cost,
        )(alpha_s, bias_s, xf)

    return out.reshape(orig_shape)


def decoder_forward(x, encoder_output, src_mask, tgt_mask, layers=(),
                    alpha=1.0, bias=0.0, eps: float = 1e-6):
    """Decoder.forward: apply layers, then the Pallas LayerNormalization."""
    # TODO(synk): the spec's decoder layers are an opaque nn.ModuleList (no
    # DecoderBlock definition is provided); any JAX-callable layers supplied
    # here are applied in order, then the Pallas layer norm is run.
    for layer in layers:
        x = layer(x, encoder_output, src_mask, tgt_mask)
    return layer_normalization(x, alpha, bias, eps=eps)


if __name__ == "__main__":
    # Small, module-consistent shapes: (batch, seq, d_model) activations.
    # seq=9 makes n_rows=18 non-tile-aligned, exercising the ragged last block;
    # d_model=128 keeps blocks lane-dense.
    batch, seq, d_model = 2, 9, 128
    eps = 1e-6

    key = jax.random.PRNGKey(0)
    k_x, k_enc = jax.random.split(key)

    x = jax.random.normal(k_x, (batch, seq, d_model), dtype=jnp.float32)
    encoder_output = jax.random.normal(k_enc, (batch, seq, d_model), dtype=jnp.float32)
    src_mask = jnp.ones((batch, 1, seq, seq), dtype=jnp.bool_)
    tgt_mask = jnp.ones((batch, 1, seq, seq), dtype=jnp.bool_)

    def ref_ln(xx, a, b):
        m = jnp.mean(xx, axis=-1, keepdims=True)
        s = jnp.std(xx, axis=-1, keepdims=True, ddof=1)  # torch unbiased std
        return a * (xx - m) / (s + eps) + b

    # Path 1: static scalar params (module defaults alpha=1, bias=0).
    out = decoder_forward(x, encoder_output, src_mask, tgt_mask,
                          layers=(), alpha=1.0, bias=0.0, eps=eps)
    out = jax.block_until_ready(out)
    assert out.shape == (batch, seq, d_model), out.shape
    # approx EUP reciprocal -> ~1e-3-relative drift; tolerance loosened accordingly.
    assert jnp.allclose(out, ref_ln(x, 1.0, 0.0), atol=5e-3, rtol=5e-3), "static path mismatch"

    # Path 2: learned (array) params go through the SMEM-scalar path.
    alpha_p = jnp.full((1,), 1.5, jnp.float32)
    bias_p = jnp.full((1,), 0.25, jnp.float32)
    out2 = layer_normalization(x, alpha_p, bias_p, eps=eps)
    out2 = jax.block_until_ready(out2)
    assert jnp.allclose(out2, ref_ln(x, 1.5, 0.25), atol=5e-3, rtol=5e-3), "smem path mismatch"

    print("KERNEL_OK")
</pallas_src>

<mosaic_0001>
module attributes {stable_mosaic.version = 11 : i64} {
  func.func @_ln_kernel_static(%arg0: i32, %arg1: memref<16x128xf32, #tpu.memory_space<vmem>>, %arg2: memref<16x128xf32, #tpu.memory_space<vmem>>) attributes {dimension_semantics = [#tpu.dimension_semantics<parallel>], iteration_bounds = array<i64: 2>, scalar_prefetch = 0 : i64, scratch_operands = 0 : i64, tpu.core_type = #tpu.core_type<tc>, window_params = [{transform_indices = @transform_0, window_bounds = array<i64: 16, 128>}, {transform_indices = @transform_1, window_bounds = array<i64: 16, 128>}]} {
    %c0 = arith.constant 0 : index
    %c0_0 = arith.constant 0 : index
    %0 = vector.load %arg1[%c0, %c0_0] : memref<16x128xf32, #tpu.memory_space<vmem>>, vector<16x128xf32>
    %cst = arith.constant dense<0.000000e+00> : vector<16xf32>
    %1 = vector.multi_reduction <add>, %0, %cst [1] : vector<16x128xf32> to vector<16xf32>
    %2 = vector.shape_cast %1 : vector<16xf32> to vector<16x1xf32>
    %3 = arith.mulf %0, %0 : vector<16x128xf32>
    %cst_1 = arith.constant dense<0.000000e+00> : vector<16xf32>
    %4 = vector.multi_reduction <add>, %3, %cst_1 [1] : vector<16x128xf32> to vector<16xf32>
    %5 = vector.shape_cast %4 : vector<16xf32> to vector<16x1xf32>
    %cst_2 = arith.constant 7.812500e-03 : f32
    %6 = vector.broadcast %cst_2 : f32 to vector<16x1xf32>
    %7 = arith.mulf %2, %6 : vector<16x1xf32>
    %8 = arith.mulf %7, %7 : vector<16x1xf32>
    %cst_3 = arith.constant 1.280000e+02 : f32
    %9 = vector.broadcast %cst_3 : f32 to vector<16x1xf32>
    %10 = arith.mulf %9, %8 : vector<16x1xf32>
    %11 = arith.subf %5, %10 : vector<16x1xf32>
    %cst_4 = arith.constant 0.000000e+00 : f32
    %12 = vector.broadcast %cst_4 : f32 to vector<16x1xf32>
    %13 = arith.maximumf %11, %12 : vector<16x1xf32>
    %cst_5 = arith.constant 0.00787401571 : f32
    %14 = vector.broadcast %cst_5 : f32 to vector<16x1xf32>
    %15 = arith.mulf %13, %14 : vector<16x1xf32>
    %16 = math.sqrt %15 : vector<16x1xf32>
    %cst_6 = arith.constant 9.99999997E-7 : f32
    %17 = vector.broadcast %cst_6 : f32 to vector<16x1xf32>
    %18 = arith.addf %16, %17 : vector<16x1xf32>
    %19 = tpu.reciprocal %18 {approx = true} : vector<16x1xf32> -> vector<16x1xf32>
    %cst_7 = arith.constant 1.000000e+00 : f32
    %20 = vector.broadcast %cst_7 : f32 to vector<16x1xf32>
    %21 = arith.mulf %20, %19 : vector<16x1xf32>
    %22 = vector.broadcast %7 : vector<16x1xf32> to vector<16x128xf32>
    %23 = arith.subf %0, %22 : vector<16x128xf32>
    %24 = vector.broadcast %21 : vector<16x1xf32> to vector<16x128xf32>
    %25 = arith.mulf %24, %23 : vector<16x128xf32>
    %cst_8 = arith.constant 0.000000e+00 : f32
    %26 = vector.broadcast %cst_8 : f32 to vector<16x128xf32>
    %27 = arith.addf %25, %26 : vector<16x128xf32>
    %c0_9 = arith.constant 0 : index
    %c0_10 = arith.constant 0 : index
    %28 = vector.load %arg2[%c0_9, %c0_10] : memref<16x128xf32, #tpu.memory_space<vmem>>, vector<16x128xf32>
    tpu.vector_store %arg2[%c0_9, %c0_10], %27 {strides = array<i32>} : memref<16x128xf32, #tpu.memory_space<vmem>>, vector<16x128xf32>,
    return
  }
  func.func @transform_0(%arg0: i32) -> (i32, i32) {
    %c0_i32 = arith.constant 0 : i32
    %c0_i32_0 = arith.constant 0 : i32
    return %arg0, %c0_i32 : i32, i32
  }
  func.func @transform_1(%arg0: i32) -> (i32, i32) {
    %c0_i32 = arith.constant 0 : i32
    %c0_i32_0 = arith.constant 0 : i32
    return %arg0, %c0_i32 : i32, i32
  }
}

</mosaic_0001>

<llo_original>
// kernel: tpu_custom_call.1
$region0: #{tpu_custom_call.1}
  #allocation0 [shape = 'u32[]', space=smem, size = 0x4, offset = 0x4, fixed_abs, tag = 'smem constant byte address 0x4 - core index']
  #allocation1 [shape = 'u32[144,128]{1,0:T(1,128)}', space=vmem, size = 0x12000, scoped, tag = 'internal scratch']
  %s0 = inlined_call_operand.hbm [shape: f32[18,128], index: 0, kind: input, shape index: {}]
  %s1 = inlined_call_operand.hbm [shape: f32[18,128], index: 1, kind: output, shape index: {}]
  %s2 = sld [smem:[#allocation0]]
  $region41: #{tpu_custom_call.1} parent=0
    _
  %s4 = ssub.s32 1, %s2
  %s5 = scalar_select 0, %s4, %s2
  $region1: #{tpu_custom_call.1} parent=0
    #allocation2 [shape = 'u8[16384]{0}', space=vmem, size = 0x4000, scoped, tag = 'input window, operand 0']
    #allocation3 [shape = 's32[2]{0}', space=sflag, size = 0x8, scoped, tag = 'scoped memory for tpu_custom_call.1']
    #allocation4 [shape = 's32[2]{0}', space=sflag, size = 0x8, scoped, tag = 'scoped memory for tpu_custom_call.1']
    #allocation5 [shape = 'u8[16384]{0}', space=vmem, size = 0x4000, scoped, tag = 'output window, operand 0']
    %6 = vsyncpa [#allocation3], 0
    %s7 = scalar_lea.sflag [#allocation3], 1
    %8 = vsyncpa %s7, 0
    %9 = vsyncpa [#allocation4], 0
    %s10 = scalar_lea.sflag [#allocation4], 1
    %11 = vsyncpa %s10, 0
    loop: start=0, step=1, limit=4
    $region2: #{tpu_custom_call.1} parent=1 // loop_pre_header
      _
    $region3: #{tpu_custom_call.1} parent=1 // loop_header
      %s13 = sphi 0, %s17
      %p14 = scmp.ge.s32.totalorder %s13, 4
      %s23 = sphi 0, %s25
      %s26 = sphi 0, %s23
      %s27 = sphi 0, %s26
      %s43 = sphi 0, %s27
      %s49 = sphi 0, %s51
      %s52 = sphi 0, %s49
      %s53 = sphi 0, %s52
      %s69 = sphi 0, %s53
    $region4: #{tpu_custom_call.1} parent=1 // loop_header_branch
      %16 = sbr.rel (%p14) target = $region8
    $region5: #{tpu_custom_call.1} parent=1 // loop_body
      %s18 = ssub.s32 %s13, 1
      %s19 = ssub.s32 %s13, 2
      %s20 = sadd.s32 %s13, 1
      %s21 = ssub.s32 %s13, %s20
      %p22 = scmp.eq.s32.totalorder %s21, 0
      %s24 = sadd.s32 %s23, 1
      %s25 = scalar_select %p22, %s23, %s24
      %p28 = pneg %p22
      %p29 = scmp.eq.s32.totalorder %s13, 1
      %p30 = por %p28, %p29
      %p31 = scmp.ne.s32.totalorder %s23, %s26
      %p32 = scmp.eq.s32.totalorder %s13, 0
      %p33 = por %p31, %p32
      %p34 = scmp.ne.s32.totalorder %s23, %s26
      %p35 = scmp.eq.s32.totalorder %s18, 1
      %p36 = por %p34, %p35
      %p37 = scmp.ne.s32.totalorder %s26, %s27
      %p38 = scmp.eq.s32.totalorder %s18, 0
      %p39 = por %p37, %p38
      %p40 = scmp.ne.s32.totalorder %s26, %s27
      %p41 = scmp.eq.s32.totalorder %s19, 1
      %p42 = por %p40, %p41
      %p44 = scmp.ne.s32.totalorder %s27, %s43
      %p45 = scmp.eq.s32.totalorder %s19, 0
      %p46 = por %p44, %p45
      %s47 = ssub.s32 %s13, %s20
      %p48 = scmp.eq.s32.totalorder %s47, 0
      %s50 = sadd.s32 %s49, 1
      %s51 = scalar_select %p48, %s49, %s50
      %p54 = pneg %p48
      %p55 = scmp.eq.s32.totalorder %s13, 1
      %p56 = por %p54, %p55
      %p57 = scmp.ne.s32.totalorder %s49, %s52
      %p58 = scmp.eq.s32.totalorder %s13, 0
      %p59 = por %p57, %p58
      %p60 = scmp.ne.s32.totalorder %s49, %s52
      %p61 = scmp.eq.s32.totalorder %s18, 1
      %p62 = por %p60, %p61
      %p63 = scmp.ne.s32.totalorder %s52, %s53
      %p64 = scmp.eq.s32.totalorder %s18, 0
      %p65 = por %p63, %p64
      %p66 = scmp.ne.s32.totalorder %s52, %s53
      %p67 = scmp.eq.s32.totalorder %s19, 1
      %p68 = por %p66, %p67
      %p70 = scmp.ne.s32.totalorder %s53, %s69
      %p71 = scmp.eq.s32.totalorder %s19, 0
      %p72 = por %p70, %p71
      %p73 = scmp.le.s32.totalorder 1, %s13
      %p74 = scmp.lt.s32.totalorder %s13, 3
      %p75 = pnand %p73, %p74
      %p76 = pneg %p75
      // Predicated region
      $region9: #{tpu_custom_call.1} parent=5 // pred_check
        _
      $region10: #{tpu_custom_call.1} parent=5 // pred_check_branch
        %78 = sbr.rel (%p75) target = $region12
      $region11: #{tpu_custom_call.1} parent=5 // pred_region
        %s79 = ssub.s32 %s13, 1
      $region12: #{tpu_custom_call.1} parent=5 // pred_fallthru
        _
      %p80 = scmp.lt.s32.totalorder %s13, 2
      // Predicated region
      $region13: #{tpu_custom_call.1} parent=5 // pred_check
        %p81 = pneg %p80
      $region14: #{tpu_custom_call.1} parent=5 // pred_check_branch
        %83 = sbr.rel (%p81) target = $region16
      $region15: #{tpu_custom_call.1} parent=5 // pred_region
        // Predicated region
        $region17: #{tpu_custom_call.1} parent=15 // pred_check
          %p84 = pneg %p33
        $region18: #{tpu_custom_call.1} parent=15 // pred_check_branch
          %86 = sbr.rel (%p84) target = $region20
        $region19: #{tpu_custom_call.1} parent=15 // pred_region
          %s87 = sand.u32 %s23, 1
          %s88 = scalar_lea.sflag [#allocation3], %s87
          %s89 = sand.u32 %s23, 1
          %s90 = smul.addr %s89, 16
          %s91 = scalar_lea.vmem [#allocation2], %s90
          %s92 = smul.u32 2, %s13
          %s93 = ssub.s32 3, %s92
          %p94 = scmp.lt.s32.totalorder %s93, 2
          %s95 = scalar_select %p94, %s93, 2
          %s96 = smul.u32 128, %s95
          %s98 = ssub.s32 256, %s96
          %99 = vsyncadd %s88, %s98
          %p100 = scmp.ne.s32.totalorder 0, %s96
          %s101 = smul.addr %s92, 128
          %s102 = scalar_lea.hbm %s0, %s101
          %s103 = smul.u32 8, %s95
          %s104 = sshll.u32 %s91, 4
          %s105 = int_to_ptr.vmem [resolvable:$true] %s104
          %s106 = sshll.u32 %s103, 4
          %110 = dma.hbm_to_vmem [thread:$0]  (%p100), %s102, %s106, %s105, %s88, 128, 128, 8
        $region20: #{tpu_custom_call.1} parent=15 // pred_fallthru
          _
      $region16: #{tpu_custom_call.1} parent=5 // pred_fallthru
        _
      %p111 = scmp.le.s32.totalorder 1, %s13
      %p112 = scmp.lt.s32.totalorder %s13, 3
      %p113 = pnand %p111, %p112
      %p114 = pneg %p113
      // Predicated region
      $region21: #{tpu_custom_call.1} parent=5 // pred_check
        _
      $region22: #{tpu_custom_call.1} parent=5 // pred_check_branch
        %116 = sbr.rel (%p113) target = $region24
      $region23: #{tpu_custom_call.1} parent=5 // pred_region
        %s117 = ssub.s32 %s13, 1
        %s118 = sand.u32 %s26, 1
        %s119 = scalar_lea.sflag [#allocation3], %s118
        %s120 = sand.u32 %s26, 1
        %s121 = smul.addr %s120, 16
        %s122 = scalar_lea.vmem [#allocation2], %s121
        // Predicated region
        $region25: #{tpu_custom_call.1} parent=23 // pred_check
          %p123 = pneg %p39
        $region26: #{tpu_custom_call.1} parent=23 // pred_check_branch
          %125 = sbr.rel (%p123) target = $region28
        $region27: #{tpu_custom_call.1} parent=23 // pred_region
          %126 = dma.done %s119, 256
        $region28: #{tpu_custom_call.1} parent=23 // pred_fallthru
          _
        %s127 = sand.u32 %s26, 1
        %s128 = scalar_lea.sflag [#allocation3], %s127
        %s129 = sand.u32 %s26, 1
        %s130 = smul.addr %s129, 16
        %s131 = scalar_lea.vmem [#allocation2], %s130
        %p132 = pneg %p39
        %p133 = pneg %p36
        %p134 = pneg %p65
        %p135 = pneg %p62
        %s136 = sand.u32 %s52, 1
        %s137 = scalar_lea.sflag [#allocation4], %s136
        %s138 = sand.u32 %s52, 1
        %s139 = smul.addr %s138, 16
        %s140 = scalar_lea.vmem [#allocation5], %s139
        %s141 = smul.u32 2, %s18
        %s142 = ssub.s32 3, %s141
        %p143 = scmp.lt.s32.totalorder %s142, 2
        %s144 = scalar_select %p143, %s142, 2
        %s145 = smul.u32 128, %s144
        %s146 = smul.u32 2, %s18
        %s147 = ssub.s32 3, %s146
        %p148 = scmp.lt.s32.totalorder %s147, 2
        %s149 = scalar_select %p148, %s147, 2
        %s150 = smul.u32 128, %s149
        %v151 = vld [vmem:[%s122] sm:$0xff]
        %v152 = vld [vmem:[%s122 + $0x8] sm:$0xff]
        %153 = vadd.xlane.f32.xlu0 %v151
        %v154 = vpop.xlane.xlu0 %153
        %155 = vadd.xlane.f32.xlu0 %v152
        %v156 = vpop.xlane.xlu0 %155
        %v157 = vmul.f32 %v151, %v151
        %v158 = vmul.f32 %v152, %v152
        %159 = vadd.xlane.f32.xlu0 %v157
        %v160 = vpop.xlane.xlu0 %159
        %161 = vadd.xlane.f32.xlu0 %v158
        %v162 = vpop.xlane.xlu0 %161
        %v163 = vmul.f32 %v154, 0.0078125
        %v164 = vmul.f32 %v156, 0.0078125
        %v165 = vmul.f32 %v163, %v163
        %v166 = vmul.f32 %v164, %v164
        %v167 = vmul.f32 %v165, 128.0
        %v168 = vmul.f32 %v166, 128.0
        %v169 = vsub.f32 %v160, %v167
        %v170 = vsub.f32 %v162, %v168
        %v171 = vmax.f32 %v169, 0.0
        %v172 = vmax.f32 %v170, 0.0
        %v173 = vmul.f32 %v171, 0.007874016
        %v174 = vmul.f32 %v172, 0.007874016
        %v175 = vrsqrt.pop %v173
        %v176 = vmul.f32 %v173, %v175
        %vm177 = vcmp.eq.f32.partialorder %v173, inf
        %v178 = vsel %vm177, %v173, %v176
        %vm179 = vcmp.eq.f32.partialorder %v173, 0.0
        %v180 = vand.u32 %v173, 2147483648
        %v181 = vsel %vm179, %v180, %v178
        %v182 = vrsqrt.pop %v174
        %v183 = vmul.f32 %v174, %v182
        %vm184 = vcmp.eq.f32.partialorder %v174, inf
        %v185 = vsel %vm184, %v174, %v183
        %vm186 = vcmp.eq.f32.partialorder %v174, 0.0
        %v187 = vand.u32 %v174, 2147483648
        %v188 = vsel %vm186, %v187, %v185
        %v189 = vadd.f32 %v181, 1e-06
        %v190 = vadd.f32 %v188, 1e-06
        %v191 = vrcp.pop %v189
        %v192 = vrcp.pop %v190
        %v193 = vsub.f32 %v151, %v163
        %v194 = vsub.f32 %v152, %v164
        %v195 = vmul.f32 %v191, %v193
        %v196 = vmul.f32 %v192, %v194
        %v197 = vadd.f32 %v195, 0.0
        %v198 = vadd.f32 %v196, 0.0
        %199 = vst [vmem:[%s140] sm:$0xff] %v197
        %200 = vst [vmem:[%s140 + $0x8] sm:$0xff] %v198
        %s201 = sand.u32 %s52, 1
        %s202 = scalar_lea.sflag [#allocation4], %s201
        %s203 = sand.u32 %s52, 1
        %s204 = smul.addr %s203, 16
        %s205 = scalar_lea.vmem [#allocation5], %s204
        // Predicated region
        $region29: #{tpu_custom_call.1} parent=23 // pred_check
          %p206 = pneg %p62
        $region30: #{tpu_custom_call.1} parent=23 // pred_check_branch
          %208 = sbr.rel (%p206) target = $region32
        $region31: #{tpu_custom_call.1} parent=23 // pred_region
          %s209 = smul.u32 2, %s18
          %s210 = ssub.s32 3, %s209
          %p211 = scmp.lt.s32.totalorder %s210, 2
          %s212 = scalar_select %p211, %s210, 2
          %s213 = smul.u32 128, %s212
          %s215 = ssub.s32 256, %s213
          %216 = vsyncadd %s202, %s215
          %p217 = scmp.ne.s32.totalorder 0, %s213
          %s218 = smul.addr %s209, 128
          %s219 = scalar_lea.hbm %s1, %s218
          %s220 = smul.u32 8, %s212
          %s221 = sshll.u32 %s205, 4
          %s222 = int_to_ptr.vmem [resolvable:$true] %s221
          %s223 = sshll.u32 %s220, 4
          %227 = dma.vmem_to_hbm [thread:$0]  (%p217), %s222, %s223, %s219, %s202, 128, 128, 8
        $region32: #{tpu_custom_call.1} parent=23 // pred_fallthru
          _
      $region24: #{tpu_custom_call.1} parent=5 // pred_fallthru
        _
      %p228 = scmp.le.s32.totalorder 2, %s13
      // Predicated region
      $region33: #{tpu_custom_call.1} parent=5 // pred_check
        %p229 = pneg %p228
      $region34: #{tpu_custom_call.1} parent=5 // pred_check_branch
        %231 = sbr.rel (%p229) target = $region36
      $region35: #{tpu_custom_call.1} parent=5 // pred_region
        %s232 = ssub.s32 %s13, 2
        // Predicated region
        $region37: #{tpu_custom_call.1} parent=35 // pred_check
          %p233 = pneg %p68
        $region38: #{tpu_custom_call.1} parent=35 // pred_check_branch
          %235 = sbr.rel (%p233) target = $region40
        $region39: #{tpu_custom_call.1} parent=35 // pred_region
          %s236 = sand.u32 %s53, 1
          %s237 = scalar_lea.sflag [#allocation4], %s236
          %s238 = sand.u32 %s53, 1
          %s239 = smul.addr %s238, 16
          %s240 = scalar_lea.vmem [#allocation5], %s239
          %241 = dma.done %s237, 256
        $region40: #{tpu_custom_call.1} parent=35 // pred_fallthru
          _
      $region36: #{tpu_custom_call.1} parent=5 // pred_fallthru
        _
    $region6: #{tpu_custom_call.1} parent=1 // loop_footer
      %s17 = sadd.s32 1, %s13
    $region7: #{tpu_custom_call.1} parent=1 // loop_footer_branch
      %12 = sbr.rel target = $region3
    $region8: #{tpu_custom_call.1} parent=1 // loop_exit
      _
    %242 = vsyncpa [#allocation3], 1
    %s243 = scalar_lea.sflag [#allocation3], 1
    %244 = vsyncpa %s243, 1
    %245 = vsyncpa [#allocation4], 1
    %s246 = scalar_lea.sflag [#allocation4], 1
    %247 = vsyncpa %s246, 1

</llo_original>
